<compile_context>
chip_gen: v7x
topology: tpu7x:2x2x1
jax: 0.10.0
libtpu: 0.0.40
codegen_flags: <defaults>
</compile_context>

<pallas_src>
import functools

import jax
import jax.numpy as jnp
from jax.experimental import pallas as pl
from jax.experimental.pallas import tpu as pltpu

_NEG_BIG = -1e30   # finite stand-in for -inf (avoids inf-inf -> NaN)
_TINY = 1e-30      # rowsum guard for isolated / padded rows


def _elu(x):
    # F.elu (alpha=1); clamp the exp argument so the unselected branch is finite.
    return jnp.where(x > 0, x, jnp.exp(jnp.minimum(x, 0.0)) - 1.0)


def _round_up(x, m):
    return (x + m - 1) // m * m


# ----------------------------- projection kernel ---------------------------
# h_aug = x @ W_aug for ALL heads at once (values + src logit + dst logit).

def _proj_kernel(x_ref, w_ref, o_ref):
    o_ref[...] = jnp.dot(x_ref[...], w_ref[...],
                         preferred_element_type=jnp.float32).astype(o_ref.dtype)


def _project(x, w_aug, tile):
    n_pad, fin = x.shape
    daug = w_aug.shape[1]
    return pl.pallas_call(
        _proj_kernel,
        out_shape=jax.ShapeDtypeStruct((n_pad, daug), jnp.float32),
        grid=(n_pad // tile,),
        in_specs=[
            pl.BlockSpec((tile, fin), lambda i: (i, 0)),
            pl.BlockSpec((fin, daug), lambda i: (0, 0)),
        ],
        out_specs=pl.BlockSpec((tile, daug), lambda i: (i, 0)),
        compiler_params=pltpu.CompilerParams(
            dimension_semantics=("parallel",)),
    )(x, w_aug)


# --------------------------- fused attention kernel -------------------------
# Grid: (row_tiles, col_tiles).  Column axis is the streamed reduction axis.
# Scratch (per row tile, per head): running max m, and acc = [e@h | e@1].

def _attn_kernel(src_ref, dstT_ref, hv_ref, adj_ref, out_ref, m_sc, acc_sc,
                 *, nheads, hdim, alpha, activation):
    j = pl.program_id(1)

    @pl.when(j == 0)
    def _():
        m_sc[...] = jnp.full(m_sc.shape, _NEG_BIG, dtype=m_sc.dtype)
        acc_sc[...] = jnp.zeros(acc_sc.shape, dtype=acc_sc.dtype)

    # Shared across all heads: one adj tile per grid step.
    mask = adj_ref[...].astype(jnp.float32) != 0.0        # (TR, TC)
    src = src_ref[...]                                    # (TR, nheads)
    dstT = dstT_ref[...]                                  # (nheads, TC)
    hv = hv_ref[...]                                      # (TC, nheads*(H+1))

    hp1 = hdim + 1
    for h in range(nheads):
        logits = src[:, h:h + 1] + dstT[h:h + 1, :]               # (TR, TC)
        z = -jnp.where(logits > 0, logits, alpha * logits)        # -leakyrelu
        z_m = jnp.where(mask, z, _NEG_BIG)
        m_old = m_sc[h]                                           # (TR, 1)
        m_new = jnp.maximum(m_old, jnp.max(z_m, axis=1, keepdims=True))
        rescale = jnp.exp(m_old - m_new)                          # in [0, 1]
        # For real edges z - m_new <= 0 exactly; min() only protects the
        # (discarded) masked-out lanes from overflow.
        p = jnp.where(mask, jnp.exp(jnp.minimum(z - m_new, 0.0)), 0.0)
        hv_h = hv[:, h * hp1:(h + 1) * hp1]                       # (TC, H+1)
        acc_sc[h] = rescale * acc_sc[h] + jnp.dot(
            p, hv_h, preferred_element_type=jnp.float32)          # MXU: e@[h|1]
        m_sc[h] = m_new

    @pl.when(j == pl.num_programs(1) - 1)
    def _():
        outs = []
        for h in range(nheads):
            acc = acc_sc[h]                                       # (TR, H+1)
            rowsum = jnp.maximum(acc[:, hdim:hdim + 1], _TINY)
            inv = pl.reciprocal(rowsum, approx=True)
            inv = inv * (2.0 - rowsum * inv)                      # Newton step
            outs.append(acc[:, :hdim] * inv)
        out = outs[0] if nheads == 1 else jnp.concatenate(outs, axis=1)
        out = _elu(out)                                           # head layers: F.elu
        if activation == "elu_tanh":                              # output layer: elu+tanh
            out = jnp.tanh(out)
        out_ref[...] = out.astype(out_ref.dtype)


def gat_multihead_layer(x_pad, adj_i8, W_list, a_list, *, alpha, activation,
                        tile=128):
    """All heads of one SpGraphAttentionLayer group as one fused kernel pair.

    Returns the concatenated (N_pad, nheads * out_features) head outputs.
    """
    n_pad, _ = x_pad.shape
    nheads = len(W_list)
    hdim = W_list[0].shape[1]

    # W_aug = [W_0 .. W_{nh-1} | W_h @ a_src_h | W_h @ a_dst_h]
    w_all = jnp.concatenate(W_list, axis=1)                           # (Fin, nh*H)
    w_src = jnp.concatenate(
        [W_list[h] @ a_list[h][:, :hdim].T for h in range(nheads)], axis=1)
    w_dst = jnp.concatenate(
        [W_list[h] @ a_list[h][:, hdim:].T for h in range(nheads)], axis=1)
    w_aug = jnp.concatenate([w_all, w_src, w_dst], axis=1).astype(jnp.float32)

    haug = _project(x_pad, w_aug, tile)               # (N_pad, nh*H + 2*nh)
    h_all = haug[:, :nheads * hdim]                   # per-head values
    src = haug[:, nheads * hdim:nheads * hdim + nheads]      # (N_pad, nh)
    dstT = haug[:, nheads * hdim + nheads:].T                # (nh, N_pad)

    # Append a ones column per head so rowsum falls out of the e@h matmul.
    hv1 = jnp.concatenate(
        [h_all.reshape(n_pad, nheads, hdim),
         jnp.ones((n_pad, nheads, 1), jnp.float32)],
        axis=-1).reshape(n_pad, nheads * (hdim + 1))

    kernel = functools.partial(_attn_kernel, nheads=nheads, hdim=hdim,
                               alpha=alpha, activation=activation)
    grid = (n_pad // tile, n_pad // tile)
    return pl.pallas_call(
        kernel,
        out_shape=jax.ShapeDtypeStruct((n_pad, nheads * hdim), jnp.float32),
        grid=grid,
        in_specs=[
            pl.BlockSpec((tile, nheads), lambda i, j: (i, 0)),               # src logits
            pl.BlockSpec((nheads, tile), lambda i, j: (0, j)),               # dst logits (row vecs)
            pl.BlockSpec((tile, nheads * (hdim + 1)), lambda i, j: (j, 0)),  # values | ones
            pl.BlockSpec((tile, tile), lambda i, j: (i, j)),                 # adj (int8)
        ],
        out_specs=pl.BlockSpec((tile, nheads * hdim), lambda i, j: (i, 0)),
        scratch_shapes=[
            pltpu.VMEM((nheads, tile, 1), jnp.float32),          # running max
            pltpu.VMEM((nheads, tile, hdim + 1), jnp.float32),   # acc | rowsum
        ],
        compiler_params=pltpu.CompilerParams(
            dimension_semantics=("parallel", "arbitrary")),
    )(src, dstT, hv1, adj_i8)


# --------------------------- parameter setup ------------------------------

def xavier_normal(key, shape, gain):
    # torch.nn.init.xavier_normal_ convention for 2D: fan_in=shape[1], fan_out=shape[0]
    fan_in, fan_out = shape[1], shape[0]
    std = gain * (2.0 / (fan_in + fan_out)) ** 0.5
    return std * jax.random.normal(key, shape, dtype=jnp.float32)


def init_spgat_params(key, nfeat, nhid, nclass, nheads):
    gain = 1.414
    params = {"heads": []}
    keys = jax.random.split(key, 2 * nheads + 2)
    for h in range(nheads):
        W = xavier_normal(keys[2 * h], (nfeat, nhid), gain)
        a = xavier_normal(keys[2 * h + 1], (1, 2 * nhid), gain)
        params["heads"].append((W, a))
    params["out_W"] = xavier_normal(keys[-2], (nhid * nheads, nclass), gain)
    params["out_a"] = xavier_normal(keys[-1], (1, 2 * nclass), gain)
    return params


# ------------------------------- forward -----------------------------------

def spgat_forward(params, x, adj, alpha, tile=128):
    # TODO(synk): F.dropout / nn.Dropout treated as identity (eval mode).
    n = x.shape[0]
    n_pad = _round_up(n, tile)

    x_pad = jnp.zeros((n_pad, x.shape[1]), jnp.float32).at[:n].set(x)
    adj_i8 = jnp.zeros((n_pad, n_pad), jnp.int8).at[:n, :n].set(
        (adj != 0).astype(jnp.int8))

    W_list = [W for (W, _) in params["heads"]]
    a_list = [a for (_, a) in params["heads"]]

    # All heads fused: output is already the concatenated (N_pad, nheads*nhid) slab.
    h1 = gat_multihead_layer(x_pad, adj_i8, W_list, a_list,
                             alpha=alpha, activation="elu", tile=tile)
    out = gat_multihead_layer(h1, adj_i8, [params["out_W"]], [params["out_a"]],
                              alpha=alpha, activation="elu_tanh", tile=tile)
    return out[:n]                                    # (N, nclass)


# --------------------------- pure-JAX reference ----------------------------

def _ref_layer(x, adj, W, a, alpha, concat):
    h = x @ W
    H = W.shape[1]
    src = h @ a[0, :H]
    dst = h @ a[0, H:]
    logits = src[:, None] + dst[None, :]
    e = jnp.exp(-jax.nn.leaky_relu(logits, negative_slope=alpha))
    e = jnp.where(adj != 0, e, 0.0)
    h_prime = (e @ h) / jnp.sum(e, axis=1, keepdims=True)
    return jax.nn.elu(h_prime) if concat else h_prime


def _ref_forward(params, x, adj, alpha):
    outs = [_ref_layer(x, adj, W, a, alpha, True) for (W, a) in params["heads"]]
    x = jnp.concatenate(outs, axis=1)
    x = jax.nn.elu(_ref_layer(x, adj, params["out_W"], params["out_a"],
                              alpha, False))
    return jnp.tanh(x)


# ---------------------------------- main -----------------------------------

if __name__ == "__main__":
    N, nfeat, nhid, nclass, nheads = 200, 16, 8, 4, 2
    alpha = 0.2

    key = jax.random.PRNGKey(0)
    k_x, k_adj, k_params = jax.random.split(key, 3)

    x = jax.random.normal(k_x, (N, nfeat), dtype=jnp.float32)
    # random sparse adjacency with guaranteed self-loops
    adj = (jax.random.uniform(k_adj, (N, N)) < 0.1).astype(jnp.float32)
    adj = jnp.maximum(adj, jnp.eye(N, dtype=jnp.float32))

    params = init_spgat_params(k_params, nfeat, nhid, nclass, nheads)

    out = jax.block_until_ready(spgat_forward(params, x, adj, alpha))
    ref = _ref_forward(params, x, adj, alpha)

    assert out.shape == (N, nclass)
    assert bool(jnp.all(jnp.isfinite(out)))
    assert jnp.allclose(out, ref, atol=1e-4, rtol=1e-4), float(
        jnp.max(jnp.abs(out - ref)))

    print("KERNEL_OK")
</pallas_src>

<mosaic_0001>
module attributes {stable_mosaic.version = 11 : i64} {
  func.func @_proj_kernel(%arg0: i32, %arg1: memref<128x16xf32, #tpu.memory_space<vmem>>, %arg2: memref<16x20xf32, #tpu.memory_space<vmem>>, %arg3: memref<128x20xf32, #tpu.memory_space<vmem>>) attributes {dimension_semantics = [#tpu.dimension_semantics<parallel>], iteration_bounds = array<i64: 2>, scalar_prefetch = 0 : i64, scratch_operands = 0 : i64, tpu.core_type = #tpu.core_type<tc>, window_params = [{transform_indices = @transform_0, window_bounds = array<i64: 128, 16>}, {pipeline_mode = #tpu.pipeline_mode<synchronous>, transform_indices = @transform_1, window_bounds = array<i64: 16, 20>}, {transform_indices = @transform_2, window_bounds = array<i64: 128, 20>}]} {
    %c0 = arith.constant 0 : index
    %c0_0 = arith.constant 0 : index
    %0 = vector.load %arg1[%c0, %c0_0] : memref<128x16xf32, #tpu.memory_space<vmem>>, vector<128x16xf32>
    %c0_1 = arith.constant 0 : index
    %c0_2 = arith.constant 0 : index
    %1 = vector.load %arg2[%c0_1, %c0_2] : memref<16x20xf32, #tpu.memory_space<vmem>>, vector<16x20xf32>
    %cst = arith.constant dense<0.000000e+00> : vector<128x20xf32>
    %2 = tpu.matmul %0, %1, %cst {dimension_numbers = #tpu.dot_dimension_numbers<[1], [0], [0], [1], [0, 0, 1, 1], [], []>} : vector<128x16xf32>, vector<16x20xf32>, vector<128x20xf32> -> vector<128x20xf32>
    %c0_3 = arith.constant 0 : index
    %c0_4 = arith.constant 0 : index
    %3 = vector.load %arg3[%c0_3, %c0_4] : memref<128x20xf32, #tpu.memory_space<vmem>>, vector<128x20xf32>
    tpu.vector_store %arg3[%c0_3, %c0_4], %2 {strides = array<i32>} : memref<128x20xf32, #tpu.memory_space<vmem>>, vector<128x20xf32>,
    return
  }
  func.func @transform_0(%arg0: i32) -> (i32, i32) {
    %c0_i32 = arith.constant 0 : i32
    %c0_i32_0 = arith.constant 0 : i32
    return %arg0, %c0_i32 : i32, i32
  }
  func.func @transform_1(%arg0: i32) -> (i32, i32) {
    %c0_i32 = arith.constant 0 : i32
    %c0_i32_0 = arith.constant 0 : i32
    %c0_i32_1 = arith.constant 0 : i32
    return %c0_i32, %c0_i32_0 : i32, i32
  }
  func.func @transform_2(%arg0: i32) -> (i32, i32) {
    %c0_i32 = arith.constant 0 : i32
    %c0_i32_0 = arith.constant 0 : i32
    return %arg0, %c0_i32 : i32, i32
  }
}

</mosaic_0001>

<llo_original>
// kernel: tpu_custom_call.1
$region0: #{tpu_custom_call.1}
  #allocation0 [shape = 'u32[]', space=smem, size = 0x4, offset = 0x4, fixed_abs, tag = 'smem constant byte address 0x4 - core index']
  #allocation1 [shape = 'u32[144,128]{1,0:T(1,128)}', space=vmem, size = 0x12000, scoped, tag = 'internal scratch']
  %s0 = inlined_call_operand.vmem [shape: f32[256,16], index: 0, kind: input, shape index: {}]
  %s1 = inlined_call_operand.vmem [shape: f32[16,20], index: 1, kind: input, shape index: {}]
  %s2 = inlined_call_operand.vmem [shape: f32[256,20], index: 2, kind: output, shape index: {}]
  %s3 = sld [smem:[#allocation0]]
  $region41: #{tpu_custom_call.1} parent=0
    _
  %s5 = ssub.s32 1, %s3
  %s6 = scalar_select 0, %s5, %s3
  loop: start=0, step=1, limit=4
  $region2: #{tpu_custom_call.1} parent=0 // loop_pre_header
    _
  $region3: #{tpu_custom_call.1} parent=0 // loop_header
    %s8 = sphi 0, %s12
    %p9 = scmp.ge.s32.totalorder %s8, 4
    %s18 = sphi 0, %s20
    %s21 = sphi 0, %s18
    %s22 = sphi 0, %s21
    %s38 = sphi 0, %s22
    %s42 = sphi 0, %s42
    %s44 = sphi 0, %s42
    %s45 = sphi 0, %s44
    %s59 = sphi 0, %s45
    %s65 = sphi 0, %s67
    %s68 = sphi 0, %s65
    %s69 = sphi 0, %s68
    %s85 = sphi 0, %s69
  $region4: #{tpu_custom_call.1} parent=0 // loop_header_branch
    %11 = sbr.rel (%p9) target = $region8
  $region5: #{tpu_custom_call.1} parent=0 // loop_body
    %s13 = ssub.s32 %s8, 1
    %s14 = ssub.s32 %s8, 2
    %s15 = sadd.s32 %s8, 1
    %s16 = ssub.s32 %s8, %s15
    %p17 = scmp.eq.s32.totalorder %s16, 0
    %s19 = sadd.s32 %s18, 1
    %s20 = scalar_select %p17, %s18, %s19
    %p23 = pneg %p17
    %p24 = scmp.eq.s32.totalorder %s8, 1
    %p25 = por %p23, %p24
    %p26 = scmp.ne.s32.totalorder %s18, %s21
    %p27 = scmp.eq.s32.totalorder %s8, 0
    %p28 = por %p26, %p27
    %p29 = scmp.ne.s32.totalorder %s18, %s21
    %p30 = scmp.eq.s32.totalorder %s13, 1
    %p31 = por %p29, %p30
    %p32 = scmp.ne.s32.totalorder %s21, %s22
    %p33 = scmp.eq.s32.totalorder %s13, 0
    %p34 = por %p32, %p33
    %p35 = scmp.ne.s32.totalorder %s21, %s22
    %p36 = scmp.eq.s32.totalorder %s14, 1
    %p37 = por %p35, %p36
    %p39 = scmp.ne.s32.totalorder %s22, %s38
    %p40 = scmp.eq.s32.totalorder %s14, 0
    %p41 = por %p39, %p40
    %s43 = sadd.s32 %s42, 1
    %p46 = scmp.eq.s32.totalorder %s8, 1
    %p47 = scmp.ne.s32.totalorder %s42, %s44
    %p48 = scmp.eq.s32.totalorder %s8, 0
    %p49 = por %p47, %p48
    %p50 = scmp.ne.s32.totalorder %s42, %s44
    %p51 = scmp.eq.s32.totalorder %s13, 1
    %p52 = por %p50, %p51
    %p53 = scmp.ne.s32.totalorder %s44, %s45
    %p54 = scmp.eq.s32.totalorder %s13, 0
    %p55 = por %p53, %p54
    %p56 = scmp.ne.s32.totalorder %s44, %s45
    %p57 = scmp.eq.s32.totalorder %s14, 1
    %p58 = por %p56, %p57
    %p60 = scmp.ne.s32.totalorder %s45, %s59
    %p61 = scmp.eq.s32.totalorder %s14, 0
    %p62 = por %p60, %p61
    %s63 = ssub.s32 %s8, %s15
    %p64 = scmp.eq.s32.totalorder %s63, 0
    %s66 = sadd.s32 %s65, 1
    %s67 = scalar_select %p64, %s65, %s66
    %p70 = pneg %p64
    %p71 = scmp.eq.s32.totalorder %s8, 1
    %p72 = por %p70, %p71
    %p73 = scmp.ne.s32.totalorder %s65, %s68
    %p74 = scmp.eq.s32.totalorder %s8, 0
    %p75 = por %p73, %p74
    %p76 = scmp.ne.s32.totalorder %s65, %s68
    %p77 = scmp.eq.s32.totalorder %s13, 1
    %p78 = por %p76, %p77
    %p79 = scmp.ne.s32.totalorder %s68, %s69
    %p80 = scmp.eq.s32.totalorder %s13, 0
    %p81 = por %p79, %p80
    %p82 = scmp.ne.s32.totalorder %s68, %s69
    %p83 = scmp.eq.s32.totalorder %s14, 1
    %p84 = por %p82, %p83
    %p86 = scmp.ne.s32.totalorder %s69, %s85
    %p87 = scmp.eq.s32.totalorder %s14, 0
    %p88 = por %p86, %p87
    %p89 = scmp.le.s32.totalorder 1, %s8
    %p90 = scmp.lt.s32.totalorder %s8, 3
    %p91 = pnand %p89, %p90
    %p92 = pneg %p91
    // Predicated region
    $region9: #{tpu_custom_call.1} parent=5 // pred_check
      _
    $region10: #{tpu_custom_call.1} parent=5 // pred_check_branch
      %94 = sbr.rel (%p91) target = $region12
    $region11: #{tpu_custom_call.1} parent=5 // pred_region
      %s95 = ssub.s32 %s8, 1
      // Predicated region
      $region13: #{tpu_custom_call.1} parent=11 // pred_check
        %p96 = pneg %p55
      $region14: #{tpu_custom_call.1} parent=11 // pred_check_branch
        %98 = sbr.rel (%p96) target = $region16
      $region15: #{tpu_custom_call.1} parent=11 // pred_region
        _
      $region16: #{tpu_custom_call.1} parent=11 // pred_fallthru
        _
    $region12: #{tpu_custom_call.1} parent=5 // pred_fallthru
      _
    %p99 = scmp.lt.s32.totalorder %s8, 2
    // Predicated region
    $region17: #{tpu_custom_call.1} parent=5 // pred_check
      %p100 = pneg %p99
    $region18: #{tpu_custom_call.1} parent=5 // pred_check_branch
      %102 = sbr.rel (%p100) target = $region20
    $region19: #{tpu_custom_call.1} parent=5 // pred_region
      // Predicated region
      $region21: #{tpu_custom_call.1} parent=19 // pred_check
        %p103 = pneg %p28
      $region22: #{tpu_custom_call.1} parent=19 // pred_check_branch
        %105 = sbr.rel (%p103) target = $region24
      $region23: #{tpu_custom_call.1} parent=19 // pred_region
        %s106 = smul.u32 16, %s8
        %p107 = scmp.lt.s32.totalorder %s106, 31
        %s108 = scalar_select %p107, %s106, 31
        %s109 = smul.addr %s108, 8
        %s110 = scalar_lea.vmem %s0, %s109
        %s111 = smul.u32 16, %s8
      $region24: #{tpu_custom_call.1} parent=19 // pred_fallthru
        _
    $region20: #{tpu_custom_call.1} parent=5 // pred_fallthru
      _
    %p112 = scmp.le.s32.totalorder 1, %s8
    %p113 = scmp.lt.s32.totalorder %s8, 3
    %p114 = pnand %p112, %p113
    %p115 = pneg %p114
    // Predicated region
    $region25: #{tpu_custom_call.1} parent=5 // pred_check
      _
    $region26: #{tpu_custom_call.1} parent=5 // pred_check_branch
      %117 = sbr.rel (%p114) target = $region28
    $region27: #{tpu_custom_call.1} parent=5 // pred_region
      %s118 = ssub.s32 %s8, 1
      %s119 = smul.u32 16, %s13
      %p120 = scmp.lt.s32.totalorder %s119, 31
      %s121 = scalar_select %p120, %s119, 31
      %s122 = smul.addr %s121, 8
      %s123 = scalar_lea.vmem %s0, %s122
      %p124 = pneg %p34
      %p125 = pneg %p31
      %p126 = pneg %p55
      %p127 = pneg %p52
      %p128 = pneg %p81
      %p129 = pneg %p78
      %s130 = smul.u32 16, %s13
      %p131 = scmp.lt.s32.totalorder %s130, 31
      %s132 = scalar_select %p131, %s130, 31
      %s133 = smul.addr %s132, 8
      %s134 = scalar_lea.vmem %s2, %s133
      %s135 = smul.u32 16, %s13
      %p136 = scmp.lt.s32.totalorder %s135, 31
      %s137 = scalar_select %p136, %s135, 31
      %s138 = smul.addr %s137, 8
      %s139 = scalar_lea.vmem %s0, %s138
      %s140 = smul.u32 16, %s13
      %s141 = smul.u32 16, %s13
      %p142 = scmp.lt.s32.totalorder %s141, 31
      %s143 = scalar_select %p142, %s141, 31
      %s144 = smul.addr %s143, 8
      %s145 = scalar_lea.vmem %s2, %s144
      %s146 = smul.u32 16, %s13
      %v147 = vld [vmem:[%s139] sm:$0xff]
      %v148 = vld [vmem:[%s139 + $0x8] sm:$0xff]
      %v149 = vld [vmem:[%s139 + $0x10] sm:$0xff]
      %v150 = vld [vmem:[%s139 + $0x18] sm:$0xff]
      %v151 = vld [vmem:[%s139 + $0x20] sm:$0xff]
      %v152 = vld [vmem:[%s139 + $0x28] sm:$0xff]
      %v153 = vld [vmem:[%s139 + $0x30] sm:$0xff]
      %v154 = vld [vmem:[%s139 + $0x38] sm:$0xff]
      %v155 = vld [vmem:[%s139 + $0x40] sm:$0xff]
      %v156 = vld [vmem:[%s139 + $0x48] sm:$0xff]
      %v157 = vld [vmem:[%s139 + $0x50] sm:$0xff]
      %v158 = vld [vmem:[%s139 + $0x58] sm:$0xff]
      %v159 = vld [vmem:[%s139 + $0x60] sm:$0xff]
      %v160 = vld [vmem:[%s139 + $0x68] sm:$0xff]
      %v161 = vld [vmem:[%s139 + $0x70] sm:$0xff]
      %v162 = vld [vmem:[%s139 + $0x78] sm:$0xff]
      %v163 = vld [vmem:[%s1] sm:$0xff]
      %v164 = vld [vmem:[%s1 + $0x8] sm:$0xff]
      %vm165 = vcmask 130048
      %v167 = vsel %vm165, %v147, 0
      %v170 = vsel %vm165, %v148, 0
      %v173 = vsel %vm165, %v149, 0
      %v176 = vsel %vm165, %v150, 0
      %v179 = vsel %vm165, %v151, 0
      %v182 = vsel %vm165, %v152, 0
      %v185 = vsel %vm165, %v153, 0
      %v188 = vsel %vm165, %v154, 0
      %v191 = vsel %vm165, %v155, 0
      %v194 = vsel %vm165, %v156, 0
      %v197 = vsel %vm165, %v157, 0
      %v200 = vsel %vm165, %v158, 0
      %v203 = vsel %vm165, %v159, 0
      %v206 = vsel %vm165, %v160, 0
      %v209 = vsel %vm165, %v161, 0
      %v212 = vsel %vm165, %v162, 0
      %214 = vmatprep.subr.mxu0 0.0
      %215 = vmatpush1.msra.mxu0 %v163
      %216 = vmatprep.subr.mxu0 0.0
      %217 = vmatpush1.msra.mxu0 %v164
      %218 = vmatprep.subr.mxu0 0.0
      %219 = vmatpush1.msra.mxu0 0.0
      %220 = vmatprep.subr.mxu0 0.0
      %221 = vmatpush1.msra.mxu0 0.0
      %222 = vmatprep.subr.mxu0 0.0
      %223 = vmatpush1.msra.mxu0 0.0
      %224 = vmatprep.subr.mxu0 0.0
      %225 = vmatpush1.msra.mxu0 0.0
      %226 = vmatprep.subr.mxu0 0.0
      %227 = vmatpush1.msra.mxu0 0.0
      %228 = vmatprep.subr.mxu0 0.0
      %229 = vmatpush1.msra.mxu0 0.0
      %230 = vmatprep.subr.mxu0 0.0
      %231 = vmatpush1.msra.mxu0 0.0
      %232 = vmatprep.subr.mxu0 0.0
      %233 = vmatpush1.msra.mxu0 0.0
      %234 = vmatprep.subr.mxu0 0.0
      %235 = vmatpush1.msra.mxu0 0.0
      %236 = vmatprep.subr.mxu0 0.0
      %237 = vmatpush1.msra.mxu0 0.0
      %238 = vmatprep.subr.mxu0 0.0
      %239 = vmatpush1.msra.mxu0 0.0
      %240 = vmatprep.subr.mxu0 0.0
      %241 = vmatpush1.msra.mxu0 0.0
      %242 = vmatprep.subr.mxu0 0.0
      %243 = vmatpush1.msra.mxu0 0.0
      %244 = vmatprep.subr.mxu0 0.0
      %245 = vmatpush1.msra.mxu0 0.0
      %246 = vmatprep.subr.mxu0 0.0
      %247 = vmatpush1.msra.mxu0 0.0
      %248 = vmatprep.subr.mxu0 0.0
      %249 = vmatpush1.msra.mxu0 0.0
      %250 = vmatprep.subr.mxu0 0.0
      %251 = vmatpush1.msra.mxu0 0.0
      %252 = vmatprep.subr.mxu0 0.0
      %253 = vmatpush1.msra.mxu0 0.0
      %254 = vmatprep.subr.mxu0 0.0
      %255 = vmatpush1.msra.mxu0 0.0
      %256 = vmatprep.subr.mxu0 0.0
      %257 = vmatpush1.msra.mxu0 0.0
      %258 = vmatprep.subr.mxu0 0.0
      %259 = vmatpush1.msra.mxu0 0.0
      %260 = vmatprep.subr.mxu0 0.0
      %261 = vmatpush1.msra.mxu0 0.0
      %262 = vmatprep.subr.mxu0 0.0
      %263 = vmatpush1.msra.mxu0 0.0
      %264 = vmatprep.subr.mxu0 0.0
      %265 = vmatpush1.msra.mxu0 0.0
      %266 = vmatprep.subr.mxu0 0.0
      %267 = vmatpush1.msra.mxu0 0.0
      %268 = vmatprep.subr.mxu0 0.0
      %269 = vmatpush1.msra.mxu0 0.0
      %270 = vmatprep.subr.mxu0 0.0
      %271 = vmatpush1.msra.mxu0 0.0
      %272 = vmatprep.subr.mxu0 0.0
      %273 = vmatpush1.msra.mxu0 0.0
      %274 = vmatprep.subr.mxu0 0.0
      %275 = vmatpush1.msra.mxu0 0.0
      %276 = vmatprep.subr.mxu0 0.0
      %277 = vmatpush1.msra.mxu0 0.0
      %278 = vmatprep.mubr.f32.mxu0 0.0
      %279 = vmatmul.mubr.f32.gmra.mrb[0].mxu0 %v167
      %v280 = vpop.f32.mrb[0].mxu0
      %v281 = vadd.f32 0.0, %v280
      %v282 = vpop.f32.mrb[0].mxu0
      %283 = vmatprep.mubr.f32.mxu0 0.0
      %284 = vmatmul.mubr.f32.gmra.mrb[0].mxu0 %v170
      %v285 = vpop.f32.mrb[0].mxu0
      %v286 = vadd.f32 0.0, %v285
      %v287 = vpop.f32.mrb[0].mxu0
      %288 = vmatprep.mubr.f32.mxu0 0.0
      %289 = vmatmul.mubr.f32.gmra.mrb[0].mxu0 %v173
      %v290 = vpop.f32.mrb[0].mxu0
      %v291 = vadd.f32 0.0, %v290
      %v292 = vpop.f32.mrb[0].mxu0
      %293 = vmatprep.mubr.f32.mxu0 0.0
      %294 = vmatmul.mubr.f32.gmra.mrb[0].mxu0 %v176
      %v295 = vpop.f32.mrb[0].mxu0
      %v296 = vadd.f32 0.0, %v295
      %v297 = vpop.f32.mrb[0].mxu0
      %298 = vmatprep.mubr.f32.mxu0 0.0
      %299 = vmatmul.mubr.f32.gmra.mrb[0].mxu0 %v179
      %v300 = vpop.f32.mrb[0].mxu0
      %v301 = vadd.f32 0.0, %v300
      %v302 = vpop.f32.mrb[0].mxu0
      %303 = vmatprep.mubr.f32.mxu0 0.0
      %304 = vmatmul.mubr.f32.gmra.mrb[0].mxu0 %v182
      %v305 = vpop.f32.mrb[0].mxu0
      %v306 = vadd.f32 0.0, %v305
      %v307 = vpop.f32.mrb[0].mxu0
      %308 = vmatprep.mubr.f32.mxu0 0.0
      %309 = vmatmul.mubr.f32.gmra.mrb[0].mxu0 %v185
      %v310 = vpop.f32.mrb[0].mxu0
      %v311 = vadd.f32 0.0, %v310
      %v312 = vpop.f32.mrb[0].mxu0
      %313 = vmatprep.mubr.f32.mxu0 0.0
      %314 = vmatmul.mubr.f32.gmra.mrb[0].mxu0 %v188
      %v315 = vpop.f32.mrb[0].mxu0
      %v316 = vadd.f32 0.0, %v315
      %v317 = vpop.f32.mrb[0].mxu0
      %318 = vmatprep.mubr.f32.mxu0 0.0
      %319 = vmatmul.mubr.f32.gmra.mrb[0].mxu0 %v191
      %v320 = vpop.f32.mrb[0].mxu0
      %v321 = vadd.f32 0.0, %v320
      %v322 = vpop.f32.mrb[0].mxu0
      %323 = vmatprep.mubr.f32.mxu0 0.0
      %324 = vmatmul.mubr.f32.gmra.mrb[0].mxu0 %v194
      %v325 = vpop.f32.mrb[0].mxu0
      %v326 = vadd.f32 0.0, %v325
      %v327 = vpop.f32.mrb[0].mxu0
      %328 = vmatprep.mubr.f32.mxu0 0.0
      %329 = vmatmul.mubr.f32.gmra.mrb[0].mxu0 %v197
      %v330 = vpop.f32.mrb[0].mxu0
      %v331 = vadd.f32 0.0, %v330
      %v332 = vpop.f32.mrb[0].mxu0
      %333 = vmatprep.mubr.f32.mxu0 0.0
      %334 = vmatmul.mubr.f32.gmra.mrb[0].mxu0 %v200
      %v335 = vpop.f32.mrb[0].mxu0
      %v336 = vadd.f32 0.0, %v335
      %v337 = vpop.f32.mrb[0].mxu0
      %338 = vmatprep.mubr.f32.mxu0 0.0
      %339 = vmatmul.mubr.f32.gmra.mrb[0].mxu0 %v203
      %v340 = vpop.f32.mrb[0].mxu0
      %v341 = vadd.f32 0.0, %v340
      %v342 = vpop.f32.mrb[0].mxu0
      %343 = vmatprep.mubr.f32.mxu0 0.0
      %344 = vmatmul.mubr.f32.gmra.mrb[0].mxu0 %v206
      %v345 = vpop.f32.mrb[0].mxu0
      %v346 = vadd.f32 0.0, %v345
      %v347 = vpop.f32.mrb[0].mxu0
      %348 = vmatprep.mubr.f32.mxu0 0.0
      %349 = vmatmul.mubr.f32.gmra.mrb[0].mxu0 %v209
      %v350 = vpop.f32.mrb[0].mxu0
      %v351 = vadd.f32 0.0, %v350
      %v352 = vpop.f32.mrb[0].mxu0
      %353 = vmatprep.mubr.f32.mxu0 0.0
      %354 = vmatmul.mubr.f32.gmra.mrb[0].mxu0 %v212
      %v355 = vpop.f32.mrb[0].mxu0
      %v356 = vadd.f32 0.0, %v355
      %v357 = vpop.f32.mrb[0].mxu0
      %358 = vdwg.mxu0
      %vm359 = vcmask 162816
      %360 = vst.msk [vmem:[%s145] sm:$0xff] %vm359, %v281
      %361 = vst.msk [vmem:[%s145 + $0x8] sm:$0xff] %vm359, %v286
      %362 = vst.msk [vmem:[%s145 + $0x10] sm:$0xff] %vm359, %v291
      %363 = vst.msk [vmem:[%s145 + $0x18] sm:$0xff] %vm359, %v296
      %364 = vst.msk [vmem:[%s145 + $0x20] sm:$0xff] %vm359, %v301
      %365 = vst.msk [vmem:[%s145 + $0x28] sm:$0xff] %vm359, %v306
      %366 = vst.msk [vmem:[%s145 + $0x30] sm:$0xff] %vm359, %v311
      %367 = vst.msk [vmem:[%s145 + $0x38] sm:$0xff] %vm359, %v316
      %368 = vst.msk [vmem:[%s145 + $0x40] sm:$0xff] %vm359, %v321
      %369 = vst.msk [vmem:[%s145 + $0x48] sm:$0xff] %vm359, %v326
      %370 = vst.msk [vmem:[%s145 + $0x50] sm:$0xff] %vm359, %v331
      %371 = vst.msk [vmem:[%s145 + $0x58] sm:$0xff] %vm359, %v336
      %372 = vst.msk [vmem:[%s145 + $0x60] sm:$0xff] %vm359, %v341
      %373 = vst.msk [vmem:[%s145 + $0x68] sm:$0xff] %vm359, %v346
      %374 = vst.msk [vmem:[%s145 + $0x70] sm:$0xff] %vm359, %v351
      %375 = vst.msk [vmem:[%s145 + $0x78] sm:$0xff] %vm359, %v356
      %s376 = smul.u32 16, %s13
      %p377 = scmp.lt.s32.totalorder %s376, 31
      %s378 = scalar_select %p377, %s376, 31
      %s379 = smul.addr %s378, 8
      %s380 = scalar_lea.vmem %s2, %s379
      // Predicated region
      $region29: #{tpu_custom_call.1} parent=27 // pred_check
        %p381 = pneg %p78
      $region30: #{tpu_custom_call.1} parent=27 // pred_check_branch
        %383 = sbr.rel (%p381) target = $region32
      $region31: #{tpu_custom_call.1} parent=27 // pred_region
        %s384 = smul.u32 16, %s13
      $region32: #{tpu_custom_call.1} parent=27 // pred_fallthru
        _
    $region28: #{tpu_custom_call.1} parent=5 // pred_fallthru
      _
    %p385 = scmp.le.s32.totalorder 2, %s8
    // Predicated region
    $region33: #{tpu_custom_call.1} parent=5 // pred_check
      %p386 = pneg %p385
    $region34: #{tpu_custom_call.1} parent=5 // pred_check_branch
      %388 = sbr.rel (%p386) target = $region36
    $region35: #{tpu_custom_call.1} parent=5 // pred_region
      %s389 = ssub.s32 %s8, 2
      // Predicated region
      $region37: #{tpu_custom_call.1} parent=35 // pred_check
        %p390 = pneg %p84
      $region38: #{tpu_custom_call.1} parent=35 // pred_check_branch
        %392 = sbr.rel (%p390) target = $region40
      $region39: #{tpu_custom_call.1} parent=35 // pred_region
        %s393 = smul.u32 16, %s14
        %p394 = scmp.lt.s32.totalorder %s393, 31
        %s395 = scalar_select %p394, %s393, 31
        %s396 = smul.addr %s395, 8
        %s397 = scalar_lea.vmem %s2, %s396
      $region40: #{tpu_custom_call.1} parent=35 // pred_fallthru
        _
    $region36: #{tpu_custom_call.1} parent=5 // pred_fallthru
      _
  $region6: #{tpu_custom_call.1} parent=0 // loop_footer
    %s12 = sadd.s32 1, %s8
  $region7: #{tpu_custom_call.1} parent=0 // loop_footer_branch
    %7 = sbr.rel target = $region3
  $region8: #{tpu_custom_call.1} parent=0 // loop_exit
    _

</llo_original>
